<compile_context>
chip_gen: v7x
topology: tpu7x:2x2x1
jax: 0.10.0
libtpu: 0.0.40
codegen_flags: <defaults>
</compile_context>

<pallas_src>
import functools

import jax
import jax.numpy as jnp
from jax import lax
from jax.experimental import pallas as pl
from jax.experimental.pallas import tpu as pltpu


def _vmem_capacity_bytes() -> int:
    try:
        return int(pltpu.get_tpu_info().vmem_capacity_bytes)
    except Exception:
        return 64 * 1024 * 1024  # conservative (v7x-sized) fallback


def _fast_reciprocal(denom):
    # EUP approx reciprocal (separate issue slot, ~free) + one Newton-Raphson
    # step restores ~f32 accuracy with two cheap VALU ops on the small array.
    r = pl.reciprocal(denom, approx=True)
    return r * (2.0 - denom * r)


# --------------------------------------------------------------------------
# Fast path: HW % 128 == 0, lane-major layout (B, C, rows, 128)
# --------------------------------------------------------------------------
def _dice_kernel_rows(x_ref, t_ref, inter_ref, union_ref, *,
                      rows_total: int, tiles_per_chunk: int, masked_tail: bool):
    # x_ref    : (1, C, TS, 128) logits (any float dtype)
    # t_ref    : (1, 1, TS, 128) int32 labels
    # inter_ref: (1, 1, C, 128) f32 accumulator (resident across the row axis)
    # union_ref: (1, 1, C, 128) f32 accumulator
    o = pl.program_id(1)
    k = pl.program_id(2)

    @pl.when(k == 0)
    def _init():
        inter_ref[...] = jnp.zeros_like(inter_ref)
        union_ref[...] = jnp.zeros_like(union_ref)

    x = x_ref[...].astype(jnp.float32)            # (1, C, TS, 128)
    t = t_ref[...]                                # (1, 1, TS, 128)
    _, C, TS, _ = x.shape

    # Channel softmax: C is a non-minor axis, so max/sum over axis=1 are just
    # (C-1) elementwise ops across full (TS, 128) vreg planes (no XLU).
    m = jnp.max(x, axis=1, keepdims=True)         # (1, 1, TS, 128)
    e = jnp.exp(x - m)                            # (1, C, TS, 128)
    denom = jnp.sum(e, axis=1, keepdims=True)     # (1, 1, TS, 128)
    p = e * _fast_reciprocal(denom)               # (1, C, TS, 128)

    # Boolean one-hot mask; never materialized as a float tensor.
    cls = lax.broadcasted_iota(jnp.int32, (1, C, 1, 1), 1)
    onehot = cls == t                             # (1, C, TS, 128) bool

    def _accumulate(oh, p_for_sum):
        # Reduce only the row (sublane) axis per step -> lane-dense partials,
        # dense 128-lane accumulator stores; 128->1 reduce happens in wrapper.
        inter = jnp.sum(jnp.where(oh, p, 0.0), axis=2)           # (1, C, 128)
        psum = jnp.sum(p_for_sum, axis=2)                        # (1, C, 128)
        tsum = jnp.sum(oh.astype(jnp.float32), axis=2)           # (1, C, 128)
        inter_ref[...] += inter[:, None]                         # (1,1,C,128)
        union_ref[...] += (psum + tsum)[:, None]

    if masked_tail:
        # Only the global last row-tile can be partial; gate the mask work so
        # every other tile takes the unmasked path at runtime.
        is_tail = jnp.logical_and(o == pl.num_programs(1) - 1,
                                  k == pl.num_programs(2) - 1)

        @pl.when(jnp.logical_not(is_tail))
        def _full():
            _accumulate(onehot, p)

        @pl.when(is_tail)
        def _tail():
            # Select-based masking: garbage (possibly NaN/Inf) rows from the
            # partial block contribute nothing to either sum.
            row = lax.broadcasted_iota(jnp.int32, (1, 1, TS, 1), 2)
            g_row = (o * tiles_per_chunk + k) * TS + row
            valid = g_row < rows_total                           # (1,1,TS,1)
            _accumulate(jnp.logical_and(onehot, valid),
                        jnp.where(valid, p, 0.0))
    else:
        _accumulate(onehot, p)


def _partials_rows(x, t, *, max_rows=None):
    """x: (B, C, HW) with HW % 128 == 0; t: (B, 1, HW) int32 -> (B, C) partials."""
    B, C, HW = x.shape
    R = HW // 128
    x4 = x.reshape(B, C, R, 128)   # free trailing reshape (no extra HBM pass)
    t4 = t.reshape(B, 1, R, 128)

    itemsize = jnp.dtype(x.dtype).itemsize
    vmem_cap = _vmem_capacity_bytes()
    budget = vmem_cap // 4          # ~32 MiB on v5e/v6e, ~16 MiB on v7x
    # double-buffered inputs + ~6 f32 C-tall temporaries + per-pixel scalars
    per_row = (2 * (C * 128 * itemsize + 128 * 4)
               + 6 * C * 128 * 4 + 4 * 128 * 4)
    ts = budget // per_row
    if max_rows is not None:
        ts = min(ts, max_rows)
    ts = min(ts, 512)               # ~65536 lanes / step upper bound
    if ts >= R:
        ts = R                      # full-extent block (any R allowed)
    else:
        ts = max(8, (ts // 8) * 8)  # sublane multiple for partial blocks

    tiles_total = pl.cdiv(R, ts)
    # v7x: give the second TensorCore work when the batch axis alone cannot
    # (B == 1) by splitting row-tiles across an extra "parallel" grid axis.
    # Only when tiles split evenly so no index_map window goes out of bounds.
    n_outer = 2 if (B == 1 and tiles_total % 2 == 0) else 1
    tiles_per_chunk = tiles_total // n_outer
    masked_tail = (R % ts) != 0

    kernel = functools.partial(_dice_kernel_rows, rows_total=R,
                               tiles_per_chunk=tiles_per_chunk,
                               masked_tail=masked_tail)

    inter, union = pl.pallas_call(
        kernel,
        out_shape=(jax.ShapeDtypeStruct((B, n_outer, C, 128), jnp.float32),
                   jax.ShapeDtypeStruct((B, n_outer, C, 128), jnp.float32)),
        grid=(B, n_outer, tiles_per_chunk),
        in_specs=[
            pl.BlockSpec((1, C, ts, 128),
                         lambda b, o, k: (b, 0, o * tiles_per_chunk + k, 0)),
            pl.BlockSpec((1, 1, ts, 128),
                         lambda b, o, k: (b, 0, o * tiles_per_chunk + k, 0)),
        ],
        out_specs=(
            pl.BlockSpec((1, 1, C, 128), lambda b, o, k: (b, o, 0, 0)),
            pl.BlockSpec((1, 1, C, 128), lambda b, o, k: (b, o, 0, 0)),
        ),
        compiler_params=pltpu.CompilerParams(
            dimension_semantics=("parallel", "parallel", "arbitrary"),
            vmem_limit_bytes=vmem_cap // 2,
        ),
    )(x4, t4)

    # lane-dense accumulators -> trivial chunk + 128-lane reduction here
    return inter.sum(axis=(1, 3)), union.sum(axis=(1, 3))


# --------------------------------------------------------------------------
# Fallback path: HW % 128 != 0, flat layout (B, C, HW), no pad, masked tail
# --------------------------------------------------------------------------
def _dice_kernel_flat(x_ref, t_ref, inter_ref, union_ref, *,
                      hw_total: int, masked_tail: bool):
    # x_ref: (1, C, T) logits; t_ref: (1, 1, T) int32; accumulators (1, C, 1).
    k = pl.program_id(1)

    @pl.when(k == 0)
    def _init():
        inter_ref[...] = jnp.zeros_like(inter_ref)
        union_ref[...] = jnp.zeros_like(union_ref)

    x = x_ref[...].astype(jnp.float32)            # (1, C, T)
    t = t_ref[...]                                # (1, 1, T)
    _, C, T = x.shape

    m = jnp.max(x, axis=1, keepdims=True)
    e = jnp.exp(x - m)
    denom = jnp.sum(e, axis=1, keepdims=True)
    p = e * _fast_reciprocal(denom)               # (1, C, T)

    cls = lax.broadcasted_iota(jnp.int32, (1, C, 1), 1)
    onehot = cls == t                             # (1, C, T) bool

    def _accumulate(oh, p_for_sum):
        inter_ref[...] += jnp.sum(jnp.where(oh, p, 0.0), axis=2, keepdims=True)
        union_ref[...] += (jnp.sum(p_for_sum, axis=2, keepdims=True)
                           + jnp.sum(oh.astype(jnp.float32), axis=2,
                                     keepdims=True))

    if masked_tail:
        is_tail = k == pl.num_programs(1) - 1

        @pl.when(jnp.logical_not(is_tail))
        def _full():
            _accumulate(onehot, p)

        @pl.when(is_tail)
        def _tail():
            # Select-based masking so uninitialized tail lanes (possible
            # NaN/Inf garbage — no pad anymore) cannot contaminate the sums.
            lane = lax.broadcasted_iota(jnp.int32, (1, 1, T), 2)
            valid = (k * T + lane) < hw_total
            _accumulate(jnp.logical_and(onehot, valid),
                        jnp.where(valid, p, 0.0))
    else:
        _accumulate(onehot, p)


def _partials_flat(x, t, *, max_lanes=None):
    """x: (B, C, HW); t: (B, 1, HW) int32 -> (B, C) partials (no padding)."""
    B, C, HW = x.shape
    itemsize = jnp.dtype(x.dtype).itemsize
    vmem_cap = _vmem_capacity_bytes()
    budget = vmem_cap // 4
    c_pad = ((C + 7) // 8) * 8          # C sits on sublanes in this layout
    per_lane = 2 * (c_pad * itemsize + 4) + 6 * c_pad * 4 + 4 * 4
    tile = budget // per_lane
    if max_lanes is not None:
        tile = min(tile, max_lanes)
    tile = min(tile, 65536)
    if tile >= HW:
        tile = HW                       # single full-extent tile, no masking
    else:
        tile = max(128, (tile // 128) * 128)
    num_tiles = pl.cdiv(HW, tile)
    masked_tail = (HW % tile) != 0

    kernel = functools.partial(_dice_kernel_flat, hw_total=HW,
                               masked_tail=masked_tail)

    inter, union = pl.pallas_call(
        kernel,
        out_shape=(jax.ShapeDtypeStruct((B, C, 1), jnp.float32),
                   jax.ShapeDtypeStruct((B, C, 1), jnp.float32)),
        grid=(B, num_tiles),
        in_specs=[
            pl.BlockSpec((1, C, tile), lambda b, k: (b, 0, k)),
            pl.BlockSpec((1, 1, tile), lambda b, k: (b, 0, k)),
        ],
        out_specs=(
            pl.BlockSpec((1, C, 1), lambda b, k: (b, 0, 0)),
            pl.BlockSpec((1, C, 1), lambda b, k: (b, 0, 0)),
        ),
        compiler_params=pltpu.CompilerParams(
            dimension_semantics=("parallel", "arbitrary"),
            vmem_limit_bytes=vmem_cap // 2,
        ),
    )(x, t)
    return inter[..., 0], union[..., 0]


# --------------------------------------------------------------------------
# Public entry point
# --------------------------------------------------------------------------
def dice_loss(inputs, targets, smooth: float = 1.0, *,
              _max_rows=None, _max_lanes=None):
    """inputs: (B, C, H, W) float logits; targets: (B, H, W) or (B, 1, H, W)."""
    if targets.ndim == 4:
        targets = jnp.squeeze(targets, axis=1)
    B, C, H, W = inputs.shape
    HW = H * W

    # Stream logits in their stored dtype (bf16 halves HBM bytes); upcast in-kernel.
    x = inputs.reshape(B, C, HW)
    # TODO(synk): if labels already exist as int8/uint8 upstream (C < 128),
    # stream them directly instead of this int32 view to cut label HBM bytes 4x.
    t = targets.reshape(B, 1, HW).astype(jnp.int32)

    if HW % 128 == 0:
        inter, union = _partials_rows(x, t, max_rows=_max_rows)
    else:
        # No jnp.pad: the (partial) last tile is select-masked in-kernel.
        inter, union = _partials_flat(x, t, max_lanes=_max_lanes)

    dice = (2.0 * inter + smooth) / (union + smooth)
    return 1.0 - jnp.mean(dice)


def _dice_loss_ref(inputs, targets, smooth: float = 1.0):
    # pure-JAX reference mirroring the PyTorch module
    if targets.ndim == 4:
        targets = jnp.squeeze(targets, axis=1)
    B, C = inputs.shape[0], inputs.shape[1]
    onehot = jax.nn.one_hot(targets, C, dtype=jnp.float32)          # (B,H,W,C)
    onehot = jnp.transpose(onehot, (0, 3, 1, 2))                    # (B,C,H,W)
    soft = jax.nn.softmax(inputs.astype(jnp.float32), axis=1)
    i_flat = soft.reshape(B, C, -1)
    t_flat = onehot.reshape(B, C, -1)
    inter = jnp.sum(i_flat * t_flat, axis=2)
    union = jnp.sum(i_flat, axis=2) + jnp.sum(t_flat, axis=2)
    dice = (2.0 * inter + smooth) / (union + smooth)
    return 1.0 - jnp.mean(dice)


if __name__ == "__main__":
    key = jax.random.PRNGKey(0)
    k1, k2, k3, k4, k5, k6 = jax.random.split(key, 6)

    def _check(x, t, **kw):
        out = jax.block_until_ready(dice_loss(x, t, smooth=1.0, **kw))
        ref = jax.block_until_ready(_dice_loss_ref(x, t, smooth=1.0))
        assert jnp.allclose(out, ref, atol=1e-5, rtol=1e-5), (out, ref)

    # 1) HW % 128 == 0 (lane-major path, single full-extent tile), (B,H,W) targets
    x1 = jax.random.normal(k1, (2, 4, 16, 16), dtype=jnp.float32)
    t1 = jax.random.randint(k2, (2, 16, 16), 0, 4, dtype=jnp.int32)
    _check(x1, t1)

    # 2) ragged HW (flat fallback path, single tile), (B,1,H,W) targets
    x2 = jax.random.normal(k3, (2, 3, 10, 13), dtype=jnp.float32)
    t2 = jax.random.randint(k4, (2, 1, 10, 13), 0, 3, dtype=jnp.int32)
    _check(x2, t2)

    # 3) lane-major path, multiple row-tiles with a masked partial tail
    x3 = jax.random.normal(k5, (2, 4, 32, 40), dtype=jnp.float32)
    t3 = jax.random.randint(k6, (2, 32, 40), 0, 4, dtype=jnp.int32)
    _check(x3, t3, _max_rows=8)

    # 4) lane-major path, B == 1 -> dual-chunk ("v7x both-TC") split + masked tail
    _check(x3[:1], t3[:1], _max_rows=8)

    # 5) flat fallback path with multiple tiles and a masked partial tail
    _check(x2, t2, _max_lanes=128)

    print("KERNEL_OK")
</pallas_src>

<mosaic_0001>
module attributes {stable_mosaic.version = 11 : i64} {
  func.func @_dice_kernel_rows(%arg0: i32, %arg1: i32, %arg2: i32, %arg3: memref<1x4x2x128xf32, #tpu.memory_space<vmem>>, %arg4: memref<1x1x2x128xi32, #tpu.memory_space<vmem>>, %arg5: memref<1x1x4x128xf32, #tpu.memory_space<vmem>>, %arg6: memref<1x1x4x128xf32, #tpu.memory_space<vmem>>) attributes {dimension_semantics = [#tpu.dimension_semantics<parallel>, #tpu.dimension_semantics<parallel>, #tpu.dimension_semantics<arbitrary>], iteration_bounds = array<i64: 2, 1, 1>, scalar_prefetch = 0 : i64, scratch_operands = 0 : i64, tpu.core_type = #tpu.core_type<tc>, window_params = [{transform_indices = @transform_0, window_bounds = array<i64: 1, 4, 2, 128>}, {transform_indices = @transform_1, window_bounds = array<i64: 1, 1, 2, 128>}, {transform_indices = @transform_2, window_bounds = array<i64: 1, 1, 4, 128>}, {transform_indices = @transform_3, window_bounds = array<i64: 1, 1, 4, 128>}]} {
    %c0_i32 = arith.constant 0 : i32
    %0 = arith.cmpi eq, %arg2, %c0_i32 : i32
    %1 = arith.extui %0 : i1 to i32
    %c0_i32_0 = arith.constant 0 : i32
    %2 = arith.cmpi ne, %1, %c0_i32_0 : i32
    scf.if %2 {
      %cst_30 = arith.constant 0.000000e+00 : f32
      %39 = vector.broadcast %cst_30 : f32 to vector<1x1x4x128xf32>
      %c0_31 = arith.constant 0 : index
      %c0_32 = arith.constant 0 : index
      %c0_33 = arith.constant 0 : index
      %c0_34 = arith.constant 0 : index
      %40 = vector.load %arg5[%c0_31, %c0_32, %c0_33, %c0_34] : memref<1x1x4x128xf32, #tpu.memory_space<vmem>>, vector<1x1x4x128xf32>
      tpu.vector_store %arg5[%c0_31, %c0_32, %c0_33, %c0_34], %39 {strides = array<i32>} : memref<1x1x4x128xf32, #tpu.memory_space<vmem>>, vector<1x1x4x128xf32>,
      %cst_35 = arith.constant 0.000000e+00 : f32
      %41 = vector.broadcast %cst_35 : f32 to vector<1x1x4x128xf32>
      %c0_36 = arith.constant 0 : index
      %c0_37 = arith.constant 0 : index
      %c0_38 = arith.constant 0 : index
      %c0_39 = arith.constant 0 : index
      %42 = vector.load %arg6[%c0_36, %c0_37, %c0_38, %c0_39] : memref<1x1x4x128xf32, #tpu.memory_space<vmem>>, vector<1x1x4x128xf32>
      tpu.vector_store %arg6[%c0_36, %c0_37, %c0_38, %c0_39], %41 {strides = array<i32>} : memref<1x1x4x128xf32, #tpu.memory_space<vmem>>, vector<1x1x4x128xf32>,
    } else {
    }
    %c0 = arith.constant 0 : index
    %c0_1 = arith.constant 0 : index
    %c0_2 = arith.constant 0 : index
    %c0_3 = arith.constant 0 : index
    %3 = vector.load %arg3[%c0, %c0_1, %c0_2, %c0_3] : memref<1x4x2x128xf32, #tpu.memory_space<vmem>>, vector<1x4x2x128xf32>
    %c0_4 = arith.constant 0 : index
    %c0_5 = arith.constant 0 : index
    %c0_6 = arith.constant 0 : index
    %c0_7 = arith.constant 0 : index
    %4 = vector.load %arg4[%c0_4, %c0_5, %c0_6, %c0_7] : memref<1x1x2x128xi32, #tpu.memory_space<vmem>>, vector<1x1x2x128xi32>
    %cst = arith.constant dense<0xFF800000> : vector<1x2x128xf32>
    %5 = vector.multi_reduction <maximumf>, %3, %cst [1] : vector<1x4x2x128xf32> to vector<1x2x128xf32>
    %6 = vector.shape_cast %5 : vector<1x2x128xf32> to vector<1x1x2x128xf32>
    %7 = vector.broadcast %6 : vector<1x1x2x128xf32> to vector<1x4x2x128xf32>
    %8 = arith.subf %3, %7 : vector<1x4x2x128xf32>
    %9 = math.exp %8 : vector<1x4x2x128xf32>
    %cst_8 = arith.constant dense<0.000000e+00> : vector<1x2x128xf32>
    %10 = vector.multi_reduction <add>, %9, %cst_8 [1] : vector<1x4x2x128xf32> to vector<1x2x128xf32>
    %11 = vector.shape_cast %10 : vector<1x2x128xf32> to vector<1x1x2x128xf32>
    %12 = tpu.reciprocal %11 {approx = true} : vector<1x1x2x128xf32> -> vector<1x1x2x128xf32>
    %13 = arith.mulf %11, %12 : vector<1x1x2x128xf32>
    %cst_9 = arith.constant 2.000000e+00 : f32
    %14 = vector.broadcast %cst_9 : f32 to vector<1x1x2x128xf32>
    %15 = arith.subf %14, %13 : vector<1x1x2x128xf32>
    %16 = arith.mulf %12, %15 : vector<1x1x2x128xf32>
    %17 = vector.broadcast %16 : vector<1x1x2x128xf32> to vector<1x4x2x128xf32>
    %18 = arith.mulf %9, %17 : vector<1x4x2x128xf32>
    %19 = tpu.iota {dimensions = array<i32: 1>} : vector<1x4x1x1xi32>
    %20 = vector.broadcast %19 : vector<1x4x1x1xi32> to vector<1x4x2x128xi32>
    %21 = vector.broadcast %4 : vector<1x1x2x128xi32> to vector<1x4x2x128xi32>
    %22 = arith.cmpi eq, %20, %21 : vector<1x4x2x128xi32>
    %cst_10 = arith.constant 0.000000e+00 : f32
    %23 = vector.broadcast %cst_10 : f32 to vector<1x4x2x128xf32>
    %24 = arith.select %22, %18, %23 : vector<1x4x2x128xi1>, vector<1x4x2x128xf32>
    %cst_11 = arith.constant dense<0.000000e+00> : vector<1x4x128xf32>
    %25 = vector.multi_reduction <add>, %24, %cst_11 [2] : vector<1x4x2x128xf32> to vector<1x4x128xf32>
    %cst_12 = arith.constant dense<0.000000e+00> : vector<1x4x128xf32>
    %26 = vector.multi_reduction <add>, %18, %cst_12 [2] : vector<1x4x2x128xf32> to vector<1x4x128xf32>
    %27 = arith.extui %22 : vector<1x4x2x128xi1> to vector<1x4x2x128xi32>
    %28 = arith.sitofp %27 : vector<1x4x2x128xi32> to vector<1x4x2x128xf32>
    %cst_13 = arith.constant dense<0.000000e+00> : vector<1x4x128xf32>
    %29 = vector.multi_reduction <add>, %28, %cst_13 [2] : vector<1x4x2x128xf32> to vector<1x4x128xf32>
    %c0_14 = arith.constant 0 : index
    %c0_15 = arith.constant 0 : index
    %c0_16 = arith.constant 0 : index
    %c0_17 = arith.constant 0 : index
    %30 = vector.load %arg5[%c0_14, %c0_15, %c0_16, %c0_17] : memref<1x1x4x128xf32, #tpu.memory_space<vmem>>, vector<1x1x4x128xf32>
    %31 = vector.shape_cast %25 : vector<1x4x128xf32> to vector<1x1x4x128xf32>
    %32 = arith.addf %30, %31 : vector<1x1x4x128xf32>
    %c0_18 = arith.constant 0 : index
    %c0_19 = arith.constant 0 : index
    %c0_20 = arith.constant 0 : index
    %c0_21 = arith.constant 0 : index
    %33 = vector.load %arg5[%c0_18, %c0_19, %c0_20, %c0_21] : memref<1x1x4x128xf32, #tpu.memory_space<vmem>>, vector<1x1x4x128xf32>
    tpu.vector_store %arg5[%c0_18, %c0_19, %c0_20, %c0_21], %32 {strides = array<i32>} : memref<1x1x4x128xf32, #tpu.memory_space<vmem>>, vector<1x1x4x128xf32>,
    %c0_22 = arith.constant 0 : index
    %c0_23 = arith.constant 0 : index
    %c0_24 = arith.constant 0 : index
    %c0_25 = arith.constant 0 : index
    %34 = vector.load %arg6[%c0_22, %c0_23, %c0_24, %c0_25] : memref<1x1x4x128xf32, #tpu.memory_space<vmem>>, vector<1x1x4x128xf32>
    %35 = arith.addf %26, %29 : vector<1x4x128xf32>
    %36 = vector.shape_cast %35 : vector<1x4x128xf32> to vector<1x1x4x128xf32>
    %37 = arith.addf %34, %36 : vector<1x1x4x128xf32>
    %c0_26 = arith.constant 0 : index
    %c0_27 = arith.constant 0 : index
    %c0_28 = arith.constant 0 : index
    %c0_29 = arith.constant 0 : index
    %38 = vector.load %arg6[%c0_26, %c0_27, %c0_28, %c0_29] : memref<1x1x4x128xf32, #tpu.memory_space<vmem>>, vector<1x1x4x128xf32>
    tpu.vector_store %arg6[%c0_26, %c0_27, %c0_28, %c0_29], %37 {strides = array<i32>} : memref<1x1x4x128xf32, #tpu.memory_space<vmem>>, vector<1x1x4x128xf32>,
    return
  }
  func.func @transform_0(%arg0: i32, %arg1: i32, %arg2: i32) -> (i32, i32, i32, i32) {
    %c1_i32 = arith.constant 1 : i32
    %0 = arith.muli %arg1, %c1_i32 : i32
    %1 = arith.addi %0, %arg2 : i32
    %c0_i32 = arith.constant 0 : i32
    %c0_i32_0 = arith.constant 0 : i32
    %c0_i32_1 = arith.constant 0 : i32
    return %arg0, %c0_i32, %1, %c0_i32_0 : i32, i32, i32, i32
  }
  func.func @transform_1(%arg0: i32, %arg1: i32, %arg2: i32) -> (i32, i32, i32, i32) {
    %c1_i32 = arith.constant 1 : i32
    %0 = arith.muli %arg1, %c1_i32 : i32
    %1 = arith.addi %0, %arg2 : i32
    %c0_i32 = arith.constant 0 : i32
    %c0_i32_0 = arith.constant 0 : i32
    %c0_i32_1 = arith.constant 0 : i32
    return %arg0, %c0_i32, %1, %c0_i32_0 : i32, i32, i32, i32
  }
  func.func @transform_2(%arg0: i32, %arg1: i32, %arg2: i32) -> (i32, i32, i32, i32) {
    %c0_i32 = arith.constant 0 : i32
    %c0_i32_0 = arith.constant 0 : i32
    %c0_i32_1 = arith.constant 0 : i32
    return %arg0, %arg1, %c0_i32, %c0_i32_0 : i32, i32, i32, i32
  }
  func.func @transform_3(%arg0: i32, %arg1: i32, %arg2: i32) -> (i32, i32, i32, i32) {
    %c0_i32 = arith.constant 0 : i32
    %c0_i32_0 = arith.constant 0 : i32
    %c0_i32_1 = arith.constant 0 : i32
    return %arg0, %arg1, %c0_i32, %c0_i32_0 : i32, i32, i32, i32
  }
}

</mosaic_0001>

<llo_original>
// kernel: tpu_custom_call.1
$region0: #{tpu_custom_call.1}
  #allocation0 [shape = 'u32[]', space=smem, size = 0x4, offset = 0x4, fixed_abs, tag = 'smem constant byte address 0x4 - core index']
  #allocation1 [shape = 'u32[144,128]{1,0:T(1,128)}', space=vmem, size = 0x12000, scoped, tag = 'internal scratch']
  %s0 = inlined_call_operand.hbm [shape: f32[2,4,2,128], index: 0, kind: input, shape index: {}]
  %s1 = inlined_call_operand.hbm [shape: s32[2,1,2,128], index: 1, kind: input, shape index: {}]
  %s2 = inlined_call_operand.hbm [shape: f32[2,1,4,128], index: 2, kind: output, shape index: {0}]
  %s3 = inlined_call_operand.hbm [shape: f32[2,1,4,128], index: 3, kind: output, shape index: {1}]
  %4 = xla_tuple %s2, %s3
  %s5 = sld [smem:[#allocation0]]
  $region61: #{tpu_custom_call.1} parent=0
    _
  %s7 = ssub.s32 1, %s5
  %s8 = scalar_select 0, %s7, %s5
  $region1: #{tpu_custom_call.1} parent=0
    #allocation2 [shape = 'u8[8192]{0}', space=vmem, size = 0x2000, scoped, tag = 'input window, operand 0']
    #allocation3 [shape = 's32[2]{0}', space=sflag, size = 0x8, scoped, tag = 'scoped memory for tpu_custom_call.1']
    #allocation4 [shape = 's32[2]{0}', space=sflag, size = 0x8, scoped, tag = 'scoped memory for tpu_custom_call.1']
    #allocation5 [shape = 'u8[2048]{0}', space=vmem, size = 0x800, scoped, tag = 'input window, operand 1']
    #allocation6 [shape = 's32[2]{0}', space=sflag, size = 0x8, scoped, tag = 'scoped memory for tpu_custom_call.1']
    #allocation7 [shape = 'u8[4096]{0}', space=vmem, size = 0x1000, scoped, tag = 'output window, operand 0']
    #allocation8 [shape = 'u8[4096]{0}', space=vmem, size = 0x1000, scoped, tag = 'output window, operand 1']
    #allocation9 [shape = 's32[2]{0}', space=sflag, size = 0x8, scoped, tag = 'scoped memory for tpu_custom_call.1']
    %9 = vsyncpa [#allocation3], 0
    %s10 = scalar_lea.sflag [#allocation3], 1
    %11 = vsyncpa %s10, 0
    %12 = vsyncpa [#allocation6], 0
    %s13 = scalar_lea.sflag [#allocation6], 1
    %14 = vsyncpa %s13, 0
    %15 = vsyncpa [#allocation4], 0
    %s16 = scalar_lea.sflag [#allocation4], 1
    %17 = vsyncpa %s16, 0
    %18 = vsyncpa [#allocation9], 0
    %s19 = scalar_lea.sflag [#allocation9], 1
    %20 = vsyncpa %s19, 0
    loop: start=0, step=1, limit=4
    $region2: #{tpu_custom_call.1} parent=1 // loop_pre_header
      _
    $region3: #{tpu_custom_call.1} parent=1 // loop_header
      %s22 = sphi 0, %s26
      %p23 = scmp.ge.s32.totalorder %s22, 4
      %s29 = sphi 0, %s48
      %s30 = sphi 0, %s44
      %s31 = sphi 0, %s40
      %s32 = sphi 0, %s29
      %s33 = sphi 0, %s30
      %s34 = sphi 0, %s31
      %s35 = sphi 0, %s32
      %s36 = sphi 0, %s33
      %s37 = sphi 0, %s34
      %s55 = sphi 0, %s57
      %s58 = sphi 0, %s55
      %s59 = sphi 0, %s58
      %s75 = sphi 0, %s59
      %s85 = sphi 0, %s87
      %s88 = sphi 0, %s85
      %s89 = sphi 0, %s88
      %s105 = sphi 0, %s89
      %s113 = sphi 0, %s115
      %s116 = sphi 0, %s113
      %s117 = sphi 0, %s116
      %s133 = sphi 0, %s117
      %s141 = sphi 0, %s143
      %s144 = sphi 0, %s141
      %s145 = sphi 0, %s144
      %s161 = sphi 0, %s145
    $region4: #{tpu_custom_call.1} parent=1 // loop_header_branch
      %25 = sbr.rel (%p23) target = $region8
    $region5: #{tpu_custom_call.1} parent=1 // loop_body
      %s27 = ssub.s32 %s22, 1
      %s28 = ssub.s32 %s22, 2
      %s38 = sadd.s32 1, %s31
      %p39 = scmp.ge.s32.totalorder %s38, 1
      %s40 = scalar_select %p39, 0, %s38
      %s41 = sadd.s32 1, %s30
      %s42 = scalar_select %p39, %s41, %s30
      %p43 = scmp.ge.s32.totalorder %s42, 1
      %s44 = scalar_select %p43, 0, %s42
      %s45 = sadd.s32 1, %s29
      %s46 = scalar_select %p43, %s45, %s29
      %p47 = scmp.ge.s32.totalorder %s46, 2
      %s48 = scalar_select %p47, 0, %s46
      %s49 = sadd.s32 %s30, %s31
      %s50 = sadd.s32 %s44, %s40
      %s51 = ssub.s32 %s29, %s48
      %s52 = ssub.s32 %s49, %s50
      %s53 = sor.u32 %s51, %s52
      %p54 = scmp.eq.s32.totalorder %s53, 0
      %s56 = sadd.s32 %s55, 1
      %s57 = scalar_select %p54, %s55, %s56
      %p60 = pneg %p54
      %p61 = scmp.eq.s32.totalorder %s22, 1
      %p62 = por %p60, %p61
      %p63 = scmp.ne.s32.totalorder %s55, %s58
      %p64 = scmp.eq.s32.totalorder %s22, 0
      %p65 = por %p63, %p64
      %p66 = scmp.ne.s32.totalorder %s55, %s58
      %p67 = scmp.eq.s32.totalorder %s27, 1
      %p68 = por %p66, %p67
      %p69 = scmp.ne.s32.totalorder %s58, %s59
      %p70 = scmp.eq.s32.totalorder %s27, 0
      %p71 = por %p69, %p70
      %p72 = scmp.ne.s32.totalorder %s58, %s59
      %p73 = scmp.eq.s32.totalorder %s28, 1
      %p74 = por %p72, %p73
      %p76 = scmp.ne.s32.totalorder %s59, %s75
      %p77 = scmp.eq.s32.totalorder %s28, 0
      %p78 = por %p76, %p77
      %s79 = sadd.s32 %s30, %s31
      %s80 = sadd.s32 %s44, %s40
      %s81 = ssub.s32 %s29, %s48
      %s82 = ssub.s32 %s79, %s80
      %s83 = sor.u32 %s81, %s82
      %p84 = scmp.eq.s32.totalorder %s83, 0
      %s86 = sadd.s32 %s85, 1
      %s87 = scalar_select %p84, %s85, %s86
      %p90 = pneg %p84
      %p91 = scmp.eq.s32.totalorder %s22, 1
      %p92 = por %p90, %p91
      %p93 = scmp.ne.s32.totalorder %s85, %s88
      %p94 = scmp.eq.s32.totalorder %s22, 0
      %p95 = por %p93, %p94
      %p96 = scmp.ne.s32.totalorder %s85, %s88
      %p97 = scmp.eq.s32.totalorder %s27, 1
      %p98 = por %p96, %p97
      %p99 = scmp.ne.s32.totalorder %s88, %s89
      %p100 = scmp.eq.s32.totalorder %s27, 0
      %p101 = por %p99, %p100
      %p102 = scmp.ne.s32.totalorder %s88, %s89
      %p103 = scmp.eq.s32.totalorder %s28, 1
      %p104 = por %p102, %p103
      %p106 = scmp.ne.s32.totalorder %s89, %s105
      %p107 = scmp.eq.s32.totalorder %s28, 0
      %p108 = por %p106, %p107
      %s109 = ssub.s32 %s29, %s48
      %s110 = ssub.s32 %s30, %s44
      %s111 = sor.u32 %s109, %s110
      %p112 = scmp.eq.s32.totalorder %s111, 0
      %s114 = sadd.s32 %s113, 1
      %s115 = scalar_select %p112, %s113, %s114
      %p118 = pneg %p112
      %p119 = scmp.eq.s32.totalorder %s22, 1
      %p120 = por %p118, %p119
      %p121 = scmp.ne.s32.totalorder %s113, %s116
      %p122 = scmp.eq.s32.totalorder %s22, 0
      %p123 = por %p121, %p122
      %p124 = scmp.ne.s32.totalorder %s113, %s116
      %p125 = scmp.eq.s32.totalorder %s27, 1
      %p126 = por %p124, %p125
      %p127 = scmp.ne.s32.totalorder %s116, %s117
      %p128 = scmp.eq.s32.totalorder %s27, 0
      %p129 = por %p127, %p128
      %p130 = scmp.ne.s32.totalorder %s116, %s117
      %p131 = scmp.eq.s32.totalorder %s28, 1
      %p132 = por %p130, %p131
      %p134 = scmp.ne.s32.totalorder %s117, %s133
      %p135 = scmp.eq.s32.totalorder %s28, 0
      %p136 = por %p134, %p135
      %s137 = ssub.s32 %s29, %s48
      %s138 = ssub.s32 %s30, %s44
      %s139 = sor.u32 %s137, %s138
      %p140 = scmp.eq.s32.totalorder %s139, 0
      %s142 = sadd.s32 %s141, 1
      %s143 = scalar_select %p140, %s141, %s142
      %p146 = pneg %p140
      %p147 = scmp.eq.s32.totalorder %s22, 1
      %p148 = por %p146, %p147
      %p149 = scmp.ne.s32.totalorder %s141, %s144
      %p150 = scmp.eq.s32.totalorder %s22, 0
      %p151 = por %p149, %p150
      %p152 = scmp.ne.s32.totalorder %s141, %s144
      %p153 = scmp.eq.s32.totalorder %s27, 1
      %p154 = por %p152, %p153
      %p155 = scmp.ne.s32.totalorder %s144, %s145
      %p156 = scmp.eq.s32.totalorder %s27, 0
      %p157 = por %p155, %p156
      %p158 = scmp.ne.s32.totalorder %s144, %s145
      %p159 = scmp.eq.s32.totalorder %s28, 1
      %p160 = por %p158, %p159
      %p162 = scmp.ne.s32.totalorder %s145, %s161
      %p163 = scmp.eq.s32.totalorder %s28, 0
      %p164 = por %p162, %p163
      %p165 = scmp.le.s32.totalorder 1, %s22
      %p166 = scmp.lt.s32.totalorder %s22, 3
      %p167 = pnand %p165, %p166
      %p168 = pneg %p167
      // Predicated region
      $region9: #{tpu_custom_call.1} parent=5 // pred_check
        _
      $region10: #{tpu_custom_call.1} parent=5 // pred_check_branch
        %170 = sbr.rel (%p167) target = $region12
      $region11: #{tpu_custom_call.1} parent=5 // pred_region
        %s171 = ssub.s32 %s22, 1
      $region12: #{tpu_custom_call.1} parent=5 // pred_fallthru
        _
      %p172 = scmp.lt.s32.totalorder %s22, 2
      // Predicated region
      $region13: #{tpu_custom_call.1} parent=5 // pred_check
        %p173 = pneg %p172
      $region14: #{tpu_custom_call.1} parent=5 // pred_check_branch
        %175 = sbr.rel (%p173) target = $region16
      $region15: #{tpu_custom_call.1} parent=5 // pred_region
        // Predicated region
        $region17: #{tpu_custom_call.1} parent=15 // pred_check
          %p176 = pneg %p65
        $region18: #{tpu_custom_call.1} parent=15 // pred_check_branch
          %178 = sbr.rel (%p176) target = $region20
        $region19: #{tpu_custom_call.1} parent=15 // pred_region
          %s179 = sand.u32 %s55, 1
          %s180 = scalar_lea.sflag [#allocation3], %s179
          %s181 = sand.u32 %s55, 1
          %s182 = smul.addr %s181, 8
          %s183 = scalar_lea.vmem [#allocation2], %s182
          %s184 = sadd.s32 %s30, %s31
          %s186 = ssub.s32 128, 128
          %187 = vsyncadd %s180, %s186
          %s188 = smul.addr %s29, 4
          %s189 = sadd.s32 %s184, %s188
          %s190 = smul.addr %s189, 32
          %s191 = scalar_lea.hbm %s0, %s190
          %s192 = sshll.u32 %s183, 4
          %s193 = int_to_ptr.vmem [resolvable:$true] %s192
          %198 = dma.hbm_to_vmem [thread:$0]  %s191, 128, %s193, %s180, 32, 32, 2
        $region20: #{tpu_custom_call.1} parent=15 // pred_fallthru
          _
        // Predicated region
        $region21: #{tpu_custom_call.1} parent=15 // pred_check
          %p199 = pneg %p95
        $region22: #{tpu_custom_call.1} parent=15 // pred_check_branch
          %201 = sbr.rel (%p199) target = $region24
        $region23: #{tpu_custom_call.1} parent=15 // pred_region
          %s202 = sand.u32 %s85, 1
          %s203 = scalar_lea.sflag [#allocation6], %s202
          %s204 = sand.u32 %s85, 1
          %s205 = smul.addr %s204, 2
          %s206 = scalar_lea.vmem [#allocation5], %s205
          %s207 = sadd.s32 %s30, %s31
          %s209 = ssub.s32 32, 32
          %210 = vsyncadd %s203, %s209
          %s211 = sadd.s32 %s207, %s29
          %s212 = smul.addr %s211, 32
          %s213 = scalar_lea.hbm %s1, %s212
          %s215 = sshll.u32 %s206, 4
          %s216 = int_to_ptr.vmem [resolvable:$true] %s215
          %218 = dma.hbm_to_vmem [thread:$0]  %s213, 32, %s216, %s203
        $region24: #{tpu_custom_call.1} parent=15 // pred_fallthru
          _
      $region16: #{tpu_custom_call.1} parent=5 // pred_fallthru
        _
      %p219 = scmp.le.s32.totalorder 1, %s22
      %p220 = scmp.lt.s32.totalorder %s22, 3
      %p221 = pnand %p219, %p220
      %p222 = pneg %p221
      // Predicated region
      $region25: #{tpu_custom_call.1} parent=5 // pred_check
        _
      $region26: #{tpu_custom_call.1} parent=5 // pred_check_branch
        %224 = sbr.rel (%p221) target = $region28
      $region27: #{tpu_custom_call.1} parent=5 // pred_region
        %s225 = ssub.s32 %s22, 1
        %s226 = sand.u32 %s58, 1
        %s227 = scalar_lea.sflag [#allocation3], %s226
        %s228 = sand.u32 %s58, 1
        %s229 = smul.addr %s228, 8
        %s230 = scalar_lea.vmem [#allocation2], %s229
        // Predicated region
        $region29: #{tpu_custom_call.1} parent=27 // pred_check
          %p231 = pneg %p71
        $region30: #{tpu_custom_call.1} parent=27 // pred_check_branch
          %233 = sbr.rel (%p231) target = $region32
        $region31: #{tpu_custom_call.1} parent=27 // pred_region
          %234 = dma.done %s227, 128
        $region32: #{tpu_custom_call.1} parent=27 // pred_fallthru
          _
        %s235 = sand.u32 %s88, 1
        %s236 = scalar_lea.sflag [#allocation6], %s235
        %s237 = sand.u32 %s88, 1
        %s238 = smul.addr %s237, 2
        %s239 = scalar_lea.vmem [#allocation5], %s238
        // Predicated region
        $region33: #{tpu_custom_call.1} parent=27 // pred_check
          %p240 = pneg %p101
        $region34: #{tpu_custom_call.1} parent=27 // pred_check_branch
          %242 = sbr.rel (%p240) target = $region36
        $region35: #{tpu_custom_call.1} parent=27 // pred_region
          %243 = dma.done %s236, 32
        $region36: #{tpu_custom_call.1} parent=27 // pred_fallthru
          _
        %s244 = sand.u32 %s58, 1
        %s245 = scalar_lea.sflag [#allocation3], %s244
        %s246 = sand.u32 %s58, 1
        %s247 = smul.addr %s246, 8
        %s248 = scalar_lea.vmem [#allocation2], %s247
        %p249 = pneg %p71
        %p250 = pneg %p68
        %s251 = sand.u32 %s88, 1
        %s252 = scalar_lea.sflag [#allocation6], %s251
        %s253 = sand.u32 %s88, 1
        %s254 = smul.addr %s253, 2
        %s255 = scalar_lea.vmem [#allocation5], %s254
        %p256 = pneg %p101
        %p257 = pneg %p98
        %p258 = pneg %p129
        %p259 = pneg %p126
        %s260 = sand.u32 %s116, 1
        %s261 = scalar_lea.sflag [#allocation4], %s260
        %s262 = sand.u32 %s116, 1
        %s263 = smul.addr %s262, 4
        %s264 = scalar_lea.vmem [#allocation7], %s263
        %p265 = pneg %p157
        %p266 = pneg %p154
        %s267 = sand.u32 %s144, 1
        %s268 = scalar_lea.sflag [#allocation9], %s267
        %s269 = sand.u32 %s144, 1
        %s270 = smul.addr %s269, 4
        %s271 = scalar_lea.vmem [#allocation8], %s270
        %s272 = sadd.s32 %s33, %s34
        %s273 = sadd.s32 %s33, %s34
        %p274 = scmp.eq.s32.totalorder %s34, 0
        // Predicated region
        $region37: #{tpu_custom_call.1} parent=27 // pred_check
          %p275 = pneg %p274
        $region38: #{tpu_custom_call.1} parent=27 // pred_check_branch
          %277 = sbr.rel (%p275) target = $region40
        $region39: #{tpu_custom_call.1} parent=27 // pred_region
          %278 = vst [vmem:[%s264] sm:$0xf] 0.0
          %279 = vst [vmem:[%s271] sm:$0xf] 0.0
        $region40: #{tpu_custom_call.1} parent=27 // pred_fallthru
          _
        %v280 = vld [vmem:[%s230] sm:$0x3]
        %v281 = vld [vmem:[%s230 + $0x2] sm:$0x3]
        %v282 = vld [vmem:[%s230 + $0x4] sm:$0x3]
        %v283 = vld [vmem:[%s230 + $0x6] sm:$0x3]
        %v284 = vld [vmem:[%s239] sm:$0x3]
        %vm285 = vcmask 1041408
        %v286 = vsel %vm285, %v280, -inf
        %v287 = vsel %vm285, %v281, -inf
        %v288 = vsel %vm285, %v282, -inf
        %v289 = vsel %vm285, %v283, -inf
        %v290 = vmax.f32 %v286, %v287
        %v291 = vmax.f32 %v288, %v289
        %v292 = vmax.f32 %v290, %v291
        %v293 = vsub.f32 %v280, %v292
        %v294 = vsub.f32 %v281, %v292
        %v295 = vsub.f32 %v282, %v292
        %v296 = vsub.f32 %v283, %v292
        %v297 = vmul.f32 %v293, 1.442695
        %v298 = vpow.pop %v297
        %v299 = vmul.f32 %v294, 1.442695
        %v300 = vpow.pop %v299
        %v301 = vmul.f32 %v295, 1.442695
        %v302 = vpow.pop %v301
        %v303 = vmul.f32 %v296, 1.442695
        %v304 = vpow.pop %v303
        %v305 = vsel %vm285, %v298, 0.0
        %v306 = vsel %vm285, %v300, 0.0
        %v307 = vadd.f32 %v305, %v306
        %v308 = vsel %vm285, %v302, 0.0
        %v309 = vadd.f32 %v307, %v308
        %v310 = vsel %vm285, %v304, 0.0
        %v311 = vadd.f32 %v309, %v310
        %v312 = vrcp.pop %v311
        %v313 = vmul.f32 %v311, %v312
        %v314 = vsub.f32 2.0, %v313
        %v315 = vmul.f32 %v312, %v314
        %v316 = vmul.f32 %v298, %v315
        %v317 = vmul.f32 %v300, %v315
        %v318 = vmul.f32 %v302, %v315
        %v319 = vmul.f32 %v304, %v315
        %vm320 = vcmp.eq.s32.totalorder %v284, 0
        %vm321 = vcmp.eq.s32.totalorder %v284, 1
        %vm322 = vcmp.eq.s32.totalorder %v284, 2
        %vm323 = vcmp.eq.s32.totalorder %v284, 3
        %v324 = vsel %vm320, %v316, 0.0
        %v325 = vsel %vm321, %v317, 0.0
        %v326 = vsel %vm322, %v318, 0.0
        %v327 = vsel %vm323, %v319, 0.0
        %v328 = vsel %vm285, %v324, 0.0
        %v329 = vrot.slane %v328, 4
        %v330 = vadd.f32 %v328, %v329
        %v331 = vrot.slane %v330, 2
        %v332 = vadd.f32 %v330, %v331
        %v333 = vrot.slane %v332, 1
        %v334 = vadd.f32 %v332, %v333
        %v335 = vsel %vm285, %v325, 0.0
        %v336 = vrot.slane %v335, 4
        %v337 = vadd.f32 %v335, %v336
        %v338 = vrot.slane %v337, 2
        %v339 = vadd.f32 %v337, %v338
        %v340 = vrot.slane %v339, 1
        %v341 = vadd.f32 %v339, %v340
        %v342 = vsel %vm285, %v326, 0.0
        %v343 = vrot.slane %v342, 4
        %v344 = vadd.f32 %v342, %v343
        %v345 = vrot.slane %v344, 2
        %v346 = vadd.f32 %v344, %v345
        %v347 = vrot.slane %v346, 1
        %v348 = vadd.f32 %v346, %v347
        %v349 = vsel %vm285, %v327, 0.0
        %v350 = vrot.slane %v349, 4
        %v351 = vadd.f32 %v349, %v350
        %v352 = vrot.slane %v351, 2
        %v353 = vadd.f32 %v351, %v352
        %v354 = vrot.slane %v353, 1
        %v355 = vadd.f32 %v353, %v354
        %v356 = vsel %vm285, %v316, 0.0
        %v357 = vrot.slane %v356, 4
        %v358 = vadd.f32 %v356, %v357
        %v359 = vrot.slane %v358, 2
        %v360 = vadd.f32 %v358, %v359
        %v361 = vrot.slane %v360, 1
        %v362 = vadd.f32 %v360, %v361
        %v363 = vsel %vm285, %v317, 0.0
        %v364 = vrot.slane %v363, 4
        %v365 = vadd.f32 %v363, %v364
        %v366 = vrot.slane %v365, 2
        %v367 = vadd.f32 %v365, %v366
        %v368 = vrot.slane %v367, 1
        %v369 = vadd.f32 %v367, %v368
        %v370 = vsel %vm285, %v318, 0.0
        %v371 = vrot.slane %v370, 4
        %v372 = vadd.f32 %v370, %v371
        %v373 = vrot.slane %v372, 2
        %v374 = vadd.f32 %v372, %v373
        %v375 = vrot.slane %v374, 1
        %v376 = vadd.f32 %v374, %v375
        %v377 = vsel %vm285, %v319, 0.0
        %v378 = vrot.slane %v377, 4
        %v379 = vadd.f32 %v377, %v378
        %v380 = vrot.slane %v379, 2
        %v381 = vadd.f32 %v379, %v380
        %v382 = vrot.slane %v381, 1
        %v383 = vadd.f32 %v381, %v382
        %v384 = vsel %vm320, 1, 0
        %v385 = vsel %vm321, 1, 0
        %v386 = vsel %vm322, 1, 0
        %v387 = vsel %vm323, 1, 0
        %v388 = vcvt.s32.f32 %v384
        %v389 = vcvt.s32.f32 %v385
        %v390 = vcvt.s32.f32 %v386
        %v391 = vcvt.s32.f32 %v387
        %v392 = vsel %vm285, %v388, 0.0
        %v393 = vrot.slane %v392, 4
        %v394 = vadd.f32 %v392, %v393
        %v395 = vrot.slane %v394, 2
        %v396 = vadd.f32 %v394, %v395
        %v397 = vrot.slane %v396, 1
        %v398 = vadd.f32 %v396, %v397
        %v399 = vsel %vm285, %v389, 0.0
        %v400 = vrot.slane %v399, 4
        %v401 = vadd.f32 %v399, %v400
        %v402 = vrot.slane %v401, 2
        %v403 = vadd.f32 %v401, %v402
        %v404 = vrot.slane %v403, 1
        %v405 = vadd.f32 %v403, %v404
        %v406 = vsel %vm285, %v390, 0.0
        %v407 = vrot.slane %v406, 4
        %v408 = vadd.f32 %v406, %v407
        %v409 = vrot.slane %v408, 2
        %v410 = vadd.f32 %v408, %v409
        %v411 = vrot.slane %v410, 1
        %v412 = vadd.f32 %v410, %v411
        %v413 = vsel %vm285, %v391, 0.0
        %v414 = vrot.slane %v413, 4
        %v415 = vadd.f32 %v413, %v414
        %v416 = vrot.slane %v415, 2
        %v417 = vadd.f32 %v415, %v416
        %v418 = vrot.slane %v417, 1
        %v419 = vadd.f32 %v417, %v418
        %v420 = vld [vmem:[%s264] sm:$0xf]
        %vm425 = vcmask 1041409
        %v426 = vsel %vm425, %v341, %v334
        %vm427 = vcmask 1042434
        %v428 = vsel %vm427, %v348, %v426
        %vm429 = vcmask 1043459
        %v430 = vsel %vm429, %v355, %v428
        %v432 = vadd.f32 %v420, %v430
        %433 = vst [vmem:[%s264] sm:$0xf] %v432
        %v434 = vld [vmem:[%s271] sm:$0xf]
        %v435 = vadd.f32 %v362, %v398
        %v436 = vadd.f32 %v369, %v405
        %v437 = vadd.f32 %v376, %v412
        %v438 = vadd.f32 %v383, %v419
        %v443 = vsel %vm425, %v436, %v435
        %v444 = vsel %vm427, %v437, %v443
        %v445 = vsel %vm429, %v438, %v444
        %v447 = vadd.f32 %v434, %v445
        %448 = vst [vmem:[%s271] sm:$0xf] %v447
        %s449 = sand.u32 %s116, 1
        %s450 = scalar_lea.sflag [#allocation4], %s449
        %s451 = sand.u32 %s116, 1
        %s452 = smul.addr %s451, 4
        %s453 = scalar_lea.vmem [#allocation7], %s452
        %s454 = sand.u32 %s144, 1
        %s455 = scalar_lea.sflag [#allocation9], %s454
        %s456 = sand.u32 %s144, 1
        %s457 = smul.addr %s456, 4
        %s458 = scalar_lea.vmem [#allocation8], %s457
        // Predicated region
        $region41: #{tpu_custom_call.1} parent=27 // pred_check
          %p459 = pneg %p126
        $region42: #{tpu_custom_call.1} parent=27 // pred_check_branch
          %461 = sbr.rel (%p459) target = $region44
        $region43: #{tpu_custom_call.1} parent=27 // pred_region
          %s463 = ssub.s32 64, 64
          %464 = vsyncadd %s450, %s463
          %s465 = sadd.s32 %s33, %s32
          %s466 = smul.addr %s465, 64
          %s467 = scalar_lea.hbm %s2, %s466
          %s469 = sshll.u32 %s453, 4
          %s470 = int_to_ptr.vmem [resolvable:$true] %s469
          %472 = dma.vmem_to_hbm [thread:$0]  %s470, 64, %s467, %s450
        $region44: #{tpu_custom_call.1} parent=27 // pred_fallthru
          _
        // Predicated region
        $region45: #{tpu_custom_call.1} parent=27 // pred_check
          %p473 = pneg %p154
        $region46: #{tpu_custom_call.1} parent=27 // pred_check_branch
          %475 = sbr.rel (%p473) target = $region48
        $region47: #{tpu_custom_call.1} parent=27 // pred_region
          %s477 = ssub.s32 64, 64
          %478 = vsyncadd %s455, %s477
          %s479 = sadd.s32 %s33, %s32
          %s480 = smul.addr %s479, 64
          %s481 = scalar_lea.hbm %s3, %s480
          %s483 = sshll.u32 %s458, 4
          %s484 = int_to_ptr.vmem [resolvable:$true] %s483
          %486 = dma.vmem_to_hbm [thread:$0]  %s484, 64, %s481, %s455
        $region48: #{tpu_custom_call.1} parent=27 // pred_fallthru
          _
      $region28: #{tpu_custom_call.1} parent=5 // pred_fallthru
        _
      %p487 = scmp.le.s32.totalorder 2, %s22
      // Predicated region
      $region49: #{tpu_custom_call.1} parent=5 // pred_check
        %p488 = pneg %p487
      $region50: #{tpu_custom_call.1} parent=5 // pred_check_branch
        %490 = sbr.rel (%p488) target = $region52
      $region51: #{tpu_custom_call.1} parent=5 // pred_region
        %s491 = ssub.s32 %s22, 2
        // Predicated region
        $region53: #{tpu_custom_call.1} parent=51 // pred_check
          %p492 = pneg %p132
        $region54: #{tpu_custom_call.1} parent=51 // pred_check_branch
          %494 = sbr.rel (%p492) target = $region56
        $region55: #{tpu_custom_call.1} parent=51 // pred_region
          %s495 = sand.u32 %s117, 1
          %s496 = scalar_lea.sflag [#allocation4], %s495
          %s497 = sand.u32 %s117, 1
          %s498 = smul.addr %s497, 4
          %s499 = scalar_lea.vmem [#allocation7], %s498
          %500 = dma.done %s496, 64
        $region56: #{tpu_custom_call.1} parent=51 // pred_fallthru
          _
        // Predicated region
        $region57: #{tpu_custom_call.1} parent=51 // pred_check
          %p501 = pneg %p160
        $region58: #{tpu_custom_call.1} parent=51 // pred_check_branch
          %503 = sbr.rel (%p501) target = $region60
        $region59: #{tpu_custom_call.1} parent=51 // pred_region
          %s504 = sand.u32 %s145, 1
          %s505 = scalar_lea.sflag [#allocation9], %s504
          %s506 = sand.u32 %s145, 1
          %s507 = smul.addr %s506, 4
          %s508 = scalar_lea.vmem [#allocation8], %s507
          %509 = dma.done %s505, 64
        $region60: #{tpu_custom_call.1} parent=51 // pred_fallthru
          _
      $region52: #{tpu_custom_call.1} parent=5 // pred_fallthru
        _
    $region6: #{tpu_custom_call.1} parent=1 // loop_footer
      %s26 = sadd.s32 1, %s22
    $region7: #{tpu_custom_call.1} parent=1 // loop_footer_branch
      %21 = sbr.rel target = $region3
    $region8: #{tpu_custom_call.1} parent=1 // loop_exit
      _
    %510 = vsyncpa [#allocation3], 1
    %s511 = scalar_lea.sflag [#allocation3], 1
    %512 = vsyncpa %s511, 1
    %513 = vsyncpa [#allocation6], 1
    %s514 = scalar_lea.sflag [#allocation6], 1
    %515 = vsyncpa %s514, 1
    %516 = vsyncpa [#allocation4], 1
    %s517 = scalar_lea.sflag [#allocation4], 1
    %518 = vsyncpa %s517, 1
    %519 = vsyncpa [#allocation9], 1
    %s520 = scalar_lea.sflag [#allocation9], 1
    %521 = vsyncpa %s520, 1

</llo_original>
